<compile_context>
chip_gen: v5e
topology: v5e:2x2
jax: 0.10.0
libtpu: 0.0.40
codegen_flags: <defaults>
</compile_context>

<pallas_src>
import functools
import math

import jax
import jax.numpy as jnp
from jax.experimental import pallas as pl
from jax.experimental.pallas import tpu as pltpu


_VMEM_LIMIT = 32 * 1024 * 1024  # explicit scoped-VMEM cap: safe on v5e/v6e/v7x


def _pick_tile(dim, candidates):
    """Largest candidate that evenly divides `dim`, else fall back to the full extent."""
    for c in candidates:
        if c <= dim and dim % c == 0:
            return c
    return dim


# ----------------------------------------------------------------------------
# Tiled linear:  y = x @ W^T + b   (PyTorch nn.Linear convention, W is (out, in))
# ----------------------------------------------------------------------------
def _linear_kernel(x_ref, w_ref, b_ref, o_ref, acc_ref):
    k = pl.program_id(2)

    @pl.when(k == 0)
    def _():
        acc_ref[...] = jnp.zeros_like(acc_ref)

    # Contract x's dim 1 against w's dim 1 directly: feeds the MXU with the
    # (out, in) weight layout, no in-kernel .T / relayout.
    acc_ref[...] += jax.lax.dot_general(
        x_ref[...], w_ref[...],
        dimension_numbers=(((1,), (1,)), ((), ())),
        preferred_element_type=jnp.float32)

    @pl.when(k == pl.num_programs(2) - 1)
    def _():
        o_ref[...] = (acc_ref[...] + b_ref[...].astype(jnp.float32)).astype(o_ref.dtype)


def pallas_linear(x2d, w, b):
    """x2d: (M, Ei), w: (Eo, Ei), b: (Eo,) -> (M, Eo)."""
    M, Ei = x2d.shape
    Eo, _ = w.shape
    tm = _pick_tile(M, (512, 256, 128))   # sublane-friendly tiles, else full extent
    tn = _pick_tile(Eo, (512, 256, 128))  # lane-friendly output tiles (>=128 -> unmasked vst)
    tk = _pick_tile(Ei, (512, 256, 128))
    grid = (M // tm, Eo // tn, Ei // tk)
    return pl.pallas_call(
        _linear_kernel,
        out_shape=jax.ShapeDtypeStruct((M, Eo), x2d.dtype),
        grid_spec=pltpu.PrefetchScalarGridSpec(
            num_scalar_prefetch=0,
            grid=grid,
            in_specs=[
                pl.BlockSpec((tm, tk), lambda i, j, k: (i, k)),
                pl.BlockSpec((tn, tk), lambda i, j, k: (j, k)),
                pl.BlockSpec((1, tn), lambda i, j, k: (0, j)),
            ],
            out_specs=pl.BlockSpec((tm, tn), lambda i, j, k: (i, j)),
            scratch_shapes=[pltpu.VMEM((tm, tn), jnp.float32)],
        ),
        compiler_params=pltpu.CompilerParams(
            dimension_semantics=("parallel", "parallel", "arbitrary"),
            vmem_limit_bytes=_VMEM_LIMIT),
    )(x2d, w, b.reshape(1, Eo))


# ----------------------------------------------------------------------------
# Scaled dot-product attention: several heads per grid step, query axis tiled.
# ----------------------------------------------------------------------------
def _attn_kernel(q_ref, k_ref, v_ref, ctx_ref, attn_ref, *, scale):
    # Fold the softmax scale into q: an (Hb, tl, Dh) multiply instead of (Hb, tl, S).
    q = q_ref[...].astype(jnp.float32) * scale       # (Hb, tl, Dh)
    k = k_ref[...].astype(jnp.float32)               # (Hb, S, Dh)
    v = v_ref[...].astype(jnp.float32)               # (Hb, S, Dh)
    s = jnp.einsum('bld,bsd->bls', q, k, preferred_element_type=jnp.float32)
    m = jnp.max(s, axis=-1, keepdims=True)
    p = jnp.exp(s - m)
    denom = jnp.sum(p, axis=-1, keepdims=True)
    a = p * pl.reciprocal(denom, approx=True)        # divide on the EUP slot
    attn_ref[...] = a.astype(attn_ref.dtype)
    ctx_ref[...] = jnp.einsum('bls,bsd->bld', a, v,
                              preferred_element_type=jnp.float32).astype(ctx_ref.dtype)


def _sdpa_tiles(BH, L, S, Dh, budget=12 * 1024 * 1024):
    """Pick (heads-per-step Hb, query-tile tl) so per-step VMEM stays bounded."""
    tl = _pick_tile(L, (512, 256, 128))
    # rough f32 bytes per head per step: double-buffered q/k/v/ctx/attn blocks + s/p temps
    per_head = 4 * (2 * (tl * Dh) + 4 * (S * Dh) + 2 * (tl * Dh)
                    + 4 * (tl * S) + 2 * (tl * S))
    hb = max(1, min(BH, budget // max(per_head, 1)))
    while BH % hb:
        hb -= 1
    return hb, tl


def pallas_sdpa(qh, kh, vh, scale):
    """qh: (BH, L, Dh), kh/vh: (BH, S, Dh) -> ctx (BH, L, Dh), attn (BH, L, S)."""
    BH, L, Dh = qh.shape
    S = kh.shape[1]
    Hb, tl = _sdpa_tiles(BH, L, S, Dh)
    grid = (BH // Hb, L // tl)
    return pl.pallas_call(
        functools.partial(_attn_kernel, scale=scale),
        out_shape=(
            jax.ShapeDtypeStruct((BH, L, Dh), jnp.float32),
            jax.ShapeDtypeStruct((BH, L, S), jnp.float32),
        ),
        grid_spec=pltpu.PrefetchScalarGridSpec(
            num_scalar_prefetch=0,
            grid=grid,
            in_specs=[
                pl.BlockSpec((Hb, tl, Dh), lambda b, l: (b, l, 0)),
                pl.BlockSpec((Hb, S, Dh), lambda b, l: (b, 0, 0)),
                pl.BlockSpec((Hb, S, Dh), lambda b, l: (b, 0, 0)),
            ],
            out_specs=(
                pl.BlockSpec((Hb, tl, Dh), lambda b, l: (b, l, 0)),
                pl.BlockSpec((Hb, tl, S), lambda b, l: (b, l, 0)),
            ),
        ),
        compiler_params=pltpu.CompilerParams(
            dimension_semantics=("parallel", "parallel"),
            vmem_limit_bytes=_VMEM_LIMIT),
    )(qh, kh, vh)


# ----------------------------------------------------------------------------
# Multihead attention forward (PyTorch nn.MultiheadAttention semantics)
# ----------------------------------------------------------------------------
def multi_head_attention_forward(query, key, value, params, num_heads):
    L, N, E = query.shape
    S = key.shape[0]
    H = num_heads
    Dh = E // H
    w_in, b_in, w_out, b_out = params   # (3E,E), (3E,), (E,E), (E,)

    if query is key and key is value:
        # Fused QKV projection (self-attention): one HBM pass over the activations,
        # 3x wider MXU N dimension, one kernel launch instead of three.
        qkv = pallas_linear(query.reshape(L * N, E), w_in, b_in)
        q, k, v = qkv[:, :E], qkv[:, E:2 * E], qkv[:, 2 * E:]
    else:
        q = pallas_linear(query.reshape(L * N, E), w_in[:E], b_in[:E])
        k = pallas_linear(key.reshape(S * N, E), w_in[E:2 * E], b_in[E:2 * E])
        v = pallas_linear(value.reshape(S * N, E), w_in[2 * E:], b_in[2 * E:])

    # TODO(synk): express the head split/merge through SDPA BlockSpec index_maps
    # (reading (L, N, H, Dh) slabs directly) to avoid these XLA-side transposes.
    qh = q.reshape(L, N, H, Dh).transpose(1, 2, 0, 3).reshape(N * H, L, Dh)
    kh = k.reshape(S, N, H, Dh).transpose(1, 2, 0, 3).reshape(N * H, S, Dh)
    vh = v.reshape(S, N, H, Dh).transpose(1, 2, 0, 3).reshape(N * H, S, Dh)

    ctx, attn = pallas_sdpa(qh, kh, vh, 1.0 / math.sqrt(Dh))

    # merge heads: (N*H, L, Dh) -> (L, N, E), then out-projection
    ctx = ctx.reshape(N, H, L, Dh).transpose(2, 0, 1, 3).reshape(L, N, E)
    x = pallas_linear(ctx.reshape(L * N, E), w_out, b_out).reshape(L, N, E)

    attn_weights = attn.reshape(N, H, L, S)   # average_attn_weights=False
    return x, attn_weights


# ----------------------------------------------------------------------------
# Wrapper reproducing WrappedMultiheadAttention.forward semantics
# ----------------------------------------------------------------------------
class WrappedMultiheadAttention:
    def __init__(self, params, num_heads, name, attention_forward_hook,
                 attention_backward_hook):
        self.params = params
        self.num_heads = num_heads
        self.name = name
        self.attention_forward_hook = attention_forward_hook
        self.attention_backward_hook = attention_backward_hook

    def __call__(self, query, key, value, **kwargs):
        need_weight = kwargs.get('need_weight', False)
        tgt_len, bsz, _ = query.shape
        src_len = key.shape[0]
        # need_weights=True, average_attn_weights=False always
        x, attention_weight_output = multi_head_attention_forward(
            query, key, value, self.params, self.num_heads)
        self.attention_forward_hook(
            self.name,
            attention_weight_output.reshape(bsz, -1, tgt_len, src_len))
        # TODO(synk): register_hook on the attention weights (gradient hook) has
        # no forward-pass Pallas equivalent; backward hooks would be attached via
        # jax.custom_vjp around this call in a training setup.
        if need_weight:
            return (x, attention_weight_output)
        return (x, None)


# ----------------------------------------------------------------------------
# Demo / self-check
# ----------------------------------------------------------------------------
if __name__ == "__main__":
    L, S, N, E, H = 8, 8, 2, 32, 4   # tgt_len, src_len, batch, embed_dim, heads

    key0 = jax.random.PRNGKey(0)
    k_q, k_k, k_v, k_win, k_bin, k_wout, k_bout = jax.random.split(key0, 7)

    query = jax.random.normal(k_q, (L, N, E), dtype=jnp.float32)
    key_t = jax.random.normal(k_k, (S, N, E), dtype=jnp.float32)
    value = jax.random.normal(k_v, (S, N, E), dtype=jnp.float32)

    # Deterministic parameter init (shapes as in nn.MultiheadAttention)
    w_in = jax.random.normal(k_win, (3 * E, E), dtype=jnp.float32) * 0.1
    b_in = jax.random.normal(k_bin, (3 * E,), dtype=jnp.float32) * 0.1
    w_out = jax.random.normal(k_wout, (E, E), dtype=jnp.float32) * 0.1
    b_out = jax.random.normal(k_bout, (E,), dtype=jnp.float32) * 0.1
    params = (w_in, b_in, w_out, b_out)

    stored = {}

    def fwd_hook(name, weights):
        stored[name] = weights

    def bwd_hook(grad):
        return grad

    # pure-JAX reference for correctness
    def ref_mha(q_in, k_in, v_in):
        Dh = E // H
        q = q_in.reshape(L * N, E) @ w_in[:E].T + b_in[:E]
        k = k_in.reshape(S * N, E) @ w_in[E:2 * E].T + b_in[E:2 * E]
        v = v_in.reshape(S * N, E) @ w_in[2 * E:].T + b_in[2 * E:]
        qh = q.reshape(L, N, H, Dh).transpose(1, 2, 0, 3)
        kh = k.reshape(S, N, H, Dh).transpose(1, 2, 0, 3)
        vh = v.reshape(S, N, H, Dh).transpose(1, 2, 0, 3)
        s = jnp.einsum('nhld,nhsd->nhls', qh, kh) / math.sqrt(Dh)
        a = jax.nn.softmax(s, axis=-1)
        c = jnp.einsum('nhls,nhsd->nhld', a, vh)
        c = c.transpose(2, 0, 1, 3).reshape(L, N, E)
        out = c.reshape(L * N, E) @ w_out.T + b_out
        return out.reshape(L, N, E), a

    mod = WrappedMultiheadAttention(params, H, "attn0", fwd_hook, bwd_hook)

    # --- cross-attention path (separate q/k/v projections) ---
    x, maybe_w = mod(query, key_t, value)
    x = jax.block_until_ready(x)

    x_ref, a_ref = ref_mha(query, key_t, value)
    assert jnp.allclose(x, x_ref, atol=5e-3, rtol=5e-3)
    assert jnp.allclose(stored["attn0"], a_ref, atol=2e-3, rtol=2e-3)
    assert x.shape == (L, N, E)
    assert stored["attn0"].shape == (N, H, L, S)
    assert maybe_w is None   # need_weight defaults to False -> (x, None)

    # --- self-attention path (fused QKV projection) ---
    x_sa, w_sa = mod(query, query, query, need_weight=True)
    x_sa = jax.block_until_ready(x_sa)

    x_sa_ref, a_sa_ref = ref_mha(query, query, query)
    assert jnp.allclose(x_sa, x_sa_ref, atol=5e-3, rtol=5e-3)
    assert jnp.allclose(stored["attn0"], a_sa_ref, atol=2e-3, rtol=2e-3)
    assert w_sa is not None and w_sa.shape == (N, H, L, S)

    print("KERNEL_OK")
</pallas_src>

<mosaic_0001>
module attributes {stable_mosaic.version = 11 : i64} {
  func.func @_linear_kernel(%arg0: i32, %arg1: i32, %arg2: i32, %arg3: memref<16x32xf32, #tpu.memory_space<vmem>>, %arg4: memref<32x32xf32, #tpu.memory_space<vmem>>, %arg5: memref<1x32xf32, #tpu.memory_space<vmem>>, %arg6: memref<16x32xf32, #tpu.memory_space<vmem>>, %arg7: memref<16x32xf32, #tpu.memory_space<vmem>>) attributes {dimension_semantics = [#tpu.dimension_semantics<parallel>, #tpu.dimension_semantics<parallel>, #tpu.dimension_semantics<arbitrary>], iteration_bounds = array<i64: 1, 1, 1>, scalar_prefetch = 0 : i64, scratch_operands = 1 : i64, tpu.core_type = #tpu.core_type<tc>, window_params = [{transform_indices = @transform_0, window_bounds = array<i64: 16, 32>}, {transform_indices = @transform_1, window_bounds = array<i64: 32, 32>}, {transform_indices = @transform_2, window_bounds = array<i64: 1, 32>}, {transform_indices = @transform_3, window_bounds = array<i64: 16, 32>}]} {
    %c0_i32 = arith.constant 0 : i32
    %0 = arith.cmpi eq, %arg2, %c0_i32 : i32
    %1 = arith.extui %0 : i1 to i32
    %c0_i32_0 = arith.constant 0 : i32
    %2 = arith.cmpi ne, %1, %c0_i32_0 : i32
    scf.if %2 {
      %cst_10 = arith.constant 0.000000e+00 : f32
      %12 = vector.broadcast %cst_10 : f32 to vector<16x32xf32>
      %c0_11 = arith.constant 0 : index
      %c0_12 = arith.constant 0 : index
      %13 = vector.load %arg7[%c0_11, %c0_12] : memref<16x32xf32, #tpu.memory_space<vmem>>, vector<16x32xf32>
      tpu.vector_store %arg7[%c0_11, %c0_12], %12 {strides = array<i32>} : memref<16x32xf32, #tpu.memory_space<vmem>>, vector<16x32xf32>,
    } else {
    }
    %c0 = arith.constant 0 : index
    %c0_1 = arith.constant 0 : index
    %3 = vector.load %arg7[%c0, %c0_1] : memref<16x32xf32, #tpu.memory_space<vmem>>, vector<16x32xf32>
    %c0_2 = arith.constant 0 : index
    %c0_3 = arith.constant 0 : index
    %4 = vector.load %arg3[%c0_2, %c0_3] : memref<16x32xf32, #tpu.memory_space<vmem>>, vector<16x32xf32>
    %c0_4 = arith.constant 0 : index
    %c0_5 = arith.constant 0 : index
    %5 = vector.load %arg4[%c0_4, %c0_5] : memref<32x32xf32, #tpu.memory_space<vmem>>, vector<32x32xf32>
    %cst = arith.constant dense<0.000000e+00> : vector<16x32xf32>
    %6 = tpu.matmul %4, %5, %cst {dimension_numbers = #tpu.dot_dimension_numbers<[1], [1], [0], [0], [0, 0, 1, 0], [], []>} : vector<16x32xf32>, vector<32x32xf32>, vector<16x32xf32> -> vector<16x32xf32>
    %7 = arith.addf %3, %6 : vector<16x32xf32>
    %c0_6 = arith.constant 0 : index
    %c0_7 = arith.constant 0 : index
    %8 = vector.load %arg7[%c0_6, %c0_7] : memref<16x32xf32, #tpu.memory_space<vmem>>, vector<16x32xf32>
    tpu.vector_store %arg7[%c0_6, %c0_7], %7 {strides = array<i32>} : memref<16x32xf32, #tpu.memory_space<vmem>>, vector<16x32xf32>,
    %c0_i32_8 = arith.constant 0 : i32
    %9 = arith.cmpi eq, %arg2, %c0_i32_8 : i32
    %10 = arith.extui %9 : i1 to i32
    %c0_i32_9 = arith.constant 0 : i32
    %11 = arith.cmpi ne, %10, %c0_i32_9 : i32
    scf.if %11 {
      %c0_10 = arith.constant 0 : index
      %c0_11 = arith.constant 0 : index
      %12 = vector.load %arg7[%c0_10, %c0_11] : memref<16x32xf32, #tpu.memory_space<vmem>>, vector<16x32xf32>
      %c0_12 = arith.constant 0 : index
      %c0_13 = arith.constant 0 : index
      %13 = vector.load %arg5[%c0_12, %c0_13] : memref<1x32xf32, #tpu.memory_space<vmem>>, vector<1x32xf32>
      %14 = vector.broadcast %13 : vector<1x32xf32> to vector<16x32xf32>
      %15 = arith.addf %12, %14 : vector<16x32xf32>
      %c0_14 = arith.constant 0 : index
      %c0_15 = arith.constant 0 : index
      %16 = vector.load %arg6[%c0_14, %c0_15] : memref<16x32xf32, #tpu.memory_space<vmem>>, vector<16x32xf32>
      tpu.vector_store %arg6[%c0_14, %c0_15], %15 {strides = array<i32>} : memref<16x32xf32, #tpu.memory_space<vmem>>, vector<16x32xf32>,
    } else {
    }
    return
  }
  func.func @transform_0(%arg0: i32, %arg1: i32, %arg2: i32) -> (i32, i32) {
    %c0_i32 = arith.constant 0 : i32
    return %arg0, %arg2 : i32, i32
  }
  func.func @transform_1(%arg0: i32, %arg1: i32, %arg2: i32) -> (i32, i32) {
    %c0_i32 = arith.constant 0 : i32
    return %arg1, %arg2 : i32, i32
  }
  func.func @transform_2(%arg0: i32, %arg1: i32, %arg2: i32) -> (i32, i32) {
    %c0_i32 = arith.constant 0 : i32
    %c0_i32_0 = arith.constant 0 : i32
    return %c0_i32, %arg1 : i32, i32
  }
  func.func @transform_3(%arg0: i32, %arg1: i32, %arg2: i32) -> (i32, i32) {
    %c0_i32 = arith.constant 0 : i32
    return %arg0, %arg1 : i32, i32
  }
}

</mosaic_0001>

<llo_original>
// kernel: tpu_custom_call.1
$region0: #{tpu_custom_call.1}
  #allocation0 [shape = 'u32[]', space=smem, size = 0x4, offset = 0x4, fixed_abs, tag = 'smem constant byte address 0x4 - core index']
  #allocation1 [shape = 'u32[72,128]{1,0:T(1,128)}', space=vmem, size = 0x9000, scoped, tag = 'internal scratch']
  #allocation2 [shape = 'f32[16,32]{1,0:T(8,128)}', space=vmem, size = 0x2000, scoped, tag = 'scratch operand']
  %s0 = inlined_call_operand.hbm [shape: f32[16,32], index: 0, kind: input, shape index: {}]
  %s1 = inlined_call_operand.hbm [shape: f32[32,32], index: 1, kind: input, shape index: {}]
  %s2 = inlined_call_operand.vmem [shape: f32[1,32], index: 2, kind: input, shape index: {}]
  %s3 = inlined_call_operand.hbm [shape: f32[16,32], index: 3, kind: output, shape index: {}]
  %s4 = sld [smem:[#allocation0]]
  $region38: #{tpu_custom_call.1} parent=0
    _
  %s6 = ssub.s32 1, %s4
  %s7 = scalar_select 0, %s6, %s4
  $region1: #{tpu_custom_call.1} parent=0
    #allocation3 [shape = 'u8[8192]{0}', space=vmem, size = 0x2000, scoped, tag = 'input window, operand 0, single buffered']
    #allocation4 [shape = 's32[1]{0}', space=sflag, size = 0x4, scoped, tag = 'scoped memory for tpu_custom_call.1']
    #allocation5 [shape = 's32[1]{0}', space=sflag, size = 0x4, scoped, tag = 'scoped memory for tpu_custom_call.1']
    #allocation6 [shape = 'u8[16384]{0}', space=vmem, size = 0x4000, scoped, tag = 'input window, operand 1, single buffered']
    #allocation7 [shape = 's32[1]{0}', space=sflag, size = 0x4, scoped, tag = 'scoped memory for tpu_custom_call.1']
    #allocation8 [shape = 'u8[8192]{0}', space=vmem, size = 0x2000, scoped, tag = 'output window, operand 0, single buffered']
    %8 = vsyncpa [#allocation4], 0
    %9 = vsyncpa [#allocation7], 0
    %10 = vsyncpa [#allocation5], 0
    // Predicated region
    $region2: #{tpu_custom_call.1} parent=1 // pred_check
      _
    $region3: #{tpu_custom_call.1} parent=1 // pred_check_branch
      %12 = sbr.rel (0) target = $region5
    $region4: #{tpu_custom_call.1} parent=1 // pred_region
      %14 = vsyncadd [#allocation4], 0
      %s15 = sshll.u32 %s0, 4
      %s16 = int_to_ptr.hbm [resolvable:$true] %s15
      %s17 = sshll.u32 [#allocation3], 4
      %s18 = int_to_ptr.vmem [resolvable:$true] %s17
      %23 = dma.hbm_to_vmem [thread:$0]  %s16, 256, %s18, [#allocation4], 128, 128, 8
    $region5: #{tpu_custom_call.1} parent=1 // pred_fallthru
      _
    // Predicated region
    $region6: #{tpu_custom_call.1} parent=1 // pred_check
      _
    $region7: #{tpu_custom_call.1} parent=1 // pred_check_branch
      %25 = sbr.rel (0) target = $region9
    $region8: #{tpu_custom_call.1} parent=1 // pred_region
      %27 = vsyncadd [#allocation7], 0
      %s28 = sshll.u32 %s1, 4
      %s29 = int_to_ptr.hbm [resolvable:$true] %s28
      %s30 = sshll.u32 [#allocation6], 4
      %s31 = int_to_ptr.vmem [resolvable:$true] %s30
      %36 = dma.hbm_to_vmem [thread:$0]  %s29, 512, %s31, [#allocation7], 128, 128, 8
    $region9: #{tpu_custom_call.1} parent=1 // pred_fallthru
      _
    // Predicated region
    $region10: #{tpu_custom_call.1} parent=1 // pred_check
      _
    $region11: #{tpu_custom_call.1} parent=1 // pred_check_branch
      %38 = sbr.rel (0) target = $region13
    $region12: #{tpu_custom_call.1} parent=1 // pred_region
      _
    $region13: #{tpu_custom_call.1} parent=1 // pred_fallthru
      _
    // Predicated region
    $region14: #{tpu_custom_call.1} parent=1 // pred_check
      _
    $region15: #{tpu_custom_call.1} parent=1 // pred_check_branch
      %40 = sbr.rel (0) target = $region17
    $region16: #{tpu_custom_call.1} parent=1 // pred_region
      %42 = dma.done [#allocation4], 256
    $region17: #{tpu_custom_call.1} parent=1 // pred_fallthru
      _
    // Predicated region
    $region18: #{tpu_custom_call.1} parent=1 // pred_check
      _
    $region19: #{tpu_custom_call.1} parent=1 // pred_check_branch
      %44 = sbr.rel (0) target = $region21
    $region20: #{tpu_custom_call.1} parent=1 // pred_region
      %46 = dma.done [#allocation7], 512
    $region21: #{tpu_custom_call.1} parent=1 // pred_fallthru
      _
    %p47 = scmp.eq.s32.totalorder 0, 0
    // Predicated region
    $region22: #{tpu_custom_call.1} parent=1 // pred_check
      %p48 = pneg %p47
    $region23: #{tpu_custom_call.1} parent=1 // pred_check_branch
      %50 = sbr.rel (%p48) target = $region25
    $region24: #{tpu_custom_call.1} parent=1 // pred_region
      %vm51 = vcmask 261120
      %52 = vst.msk [vmem:[#allocation2] sm:$0xff] %vm51, 0.0
      %53 = vst.msk [vmem:[#allocation2 + $0x8] sm:$0xff] %vm51, 0.0
    $region25: #{tpu_custom_call.1} parent=1 // pred_fallthru
      _
    %v54 = vld [vmem:[#allocation2] sm:$0xff]
    %v55 = vld [vmem:[#allocation2 + $0x8] sm:$0xff]
    %v56 = vld [vmem:[#allocation3] sm:$0xff]
    %v57 = vld [vmem:[#allocation3 + $0x8] sm:$0xff]
    %v58 = vld [vmem:[#allocation6] sm:$0xff]
    %v59 = vld [vmem:[#allocation6 + $0x8] sm:$0xff]
    %v60 = vld [vmem:[#allocation6 + $0x10] sm:$0xff]
    %v61 = vld [vmem:[#allocation6 + $0x18] sm:$0xff]
    %vm62 = vcmask 261120
    %v64 = vsel %vm62, %v56, 0
    %v67 = vsel %vm62, %v57, 0
    %v70 = vsel %vm62, %v58, 0
    %v73 = vsel %vm62, %v59, 0
    %v76 = vsel %vm62, %v60, 0
    %v79 = vsel %vm62, %v61, 0
    %81 = vmatpush.xpose.msra.mxu0 0.0
    %82 = vmatpush.xpose.msra.mxu0 0.0
    %83 = vmatpush.xpose.msra.mxu0 0.0
    %84 = vmatpush.xpose.msra.mxu0 0.0
    %85 = vmatpush.xpose.msra.mxu0 0.0
    %86 = vmatpush.xpose.msra.mxu0 0.0
    %87 = vmatpush.xpose.msra.mxu0 0.0
    %88 = vmatpush.xpose.msra.mxu0 0.0
    %89 = vmatpush.xpose.msra.mxu0 0.0
    %90 = vmatpush.xpose.msra.mxu0 0.0
    %91 = vmatpush.xpose.msra.mxu0 0.0
    %92 = vmatpush.xpose.msra.mxu0 0.0
    %93 = vmatpush.xpose.msra.mxu0 %v79
    %94 = vmatpush.xpose.msra.mxu0 %v76
    %95 = vmatpush.xpose.msra.mxu0 %v73
    %96 = vmatpush.xpose.msra.mxu0 %v70
    %97 = vmatmul.f32.gmra.mxu0 %v64
    %v98 = vpop.f32.mrf.mxu0
    %v99 = vadd.f32 0.0, %v98
    %100 = vmatmul.f32.gmra.mxu0 %v67
    %v101 = vpop.f32.mrf.mxu0
    %v102 = vadd.f32 0.0, %v101
    %103 = vdwg.mxu0
    %v104 = vadd.f32 %v54, %v99
    %v105 = vadd.f32 %v55, %v102
    %106 = vst.msk [vmem:[#allocation2] sm:$0xff] %vm62, %v104
    %107 = vst.msk [vmem:[#allocation2 + $0x8] sm:$0xff] %vm62, %v105
    // Predicated region
    $region26: #{tpu_custom_call.1} parent=1 // pred_check
      %p108 = pneg %p47
    $region27: #{tpu_custom_call.1} parent=1 // pred_check_branch
      %110 = sbr.rel (%p108) target = $region29
    $region28: #{tpu_custom_call.1} parent=1 // pred_region
      %v111 = vld [vmem:[#allocation2] sm:$0xff]
      %v112 = vld [vmem:[#allocation2 + $0x8] sm:$0xff]
      %v113 = vld [vmem:[%s2] sm:$0x1]
      %v115 = vperm.slane %v113, 0
      %v117 = vadd.f32 %v111, %v115
      %v118 = vadd.f32 %v112, %v115
      %119 = vst.msk [vmem:[#allocation8] sm:$0xff] %vm62, %v117
      %120 = vst.msk [vmem:[#allocation8 + $0x8] sm:$0xff] %vm62, %v118
    $region29: #{tpu_custom_call.1} parent=1 // pred_fallthru
      _
    // Predicated region
    $region30: #{tpu_custom_call.1} parent=1 // pred_check
      _
    $region31: #{tpu_custom_call.1} parent=1 // pred_check_branch
      %122 = sbr.rel (0) target = $region33
    $region32: #{tpu_custom_call.1} parent=1 // pred_region
      %124 = vsyncadd [#allocation5], 0
      %s125 = sshll.u32 [#allocation8], 4
      %s126 = int_to_ptr.vmem [resolvable:$true] %s125
      %s127 = sshll.u32 %s3, 4
      %s128 = int_to_ptr.hbm [resolvable:$true] %s127
      %133 = dma.vmem_to_hbm [thread:$0]  %s126, 256, %s128, [#allocation5], 128, 128, 8
    $region33: #{tpu_custom_call.1} parent=1 // pred_fallthru
      _
    // Predicated region
    $region34: #{tpu_custom_call.1} parent=1 // pred_check
      _
    $region35: #{tpu_custom_call.1} parent=1 // pred_check_branch
      %135 = sbr.rel (0) target = $region37
    $region36: #{tpu_custom_call.1} parent=1 // pred_region
      %137 = dma.done [#allocation5], 256
    $region37: #{tpu_custom_call.1} parent=1 // pred_fallthru
      _
    %138 = vsyncpa [#allocation4], 1
    %139 = vsyncpa [#allocation7], 1
    %140 = vsyncpa [#allocation5], 1

</llo_original>
